<compile_context>
chip_gen: v7x
topology: tpu7x:2x2x1
jax: 0.10.0
libtpu: 0.0.40
codegen_flags: <defaults>
</compile_context>

<pallas_src>
import math
from functools import partial

import jax
import jax.numpy as jnp
from jax.experimental import pallas as pl
from jax.experimental.pallas import tpu as pltpu


NONZERO_NODES_INDEX = (9,)   # matches the PyTorch DecoderF default (dec_f of ModelFtD)
NUM_NODES = 10


def _round_up(n, m):
    return ((n + m - 1) // m) * m


def _decoder_f_kernel(x_ref, o_ref, *, nonzero_nodes_index, num_nodes):
    """x_ref: [TB, 2k]  ->  o_ref: [TB, 2*num_nodes] (flattened node/coord axes).

    Builds the scattered row fully in vregs (static zero runs + input column
    pairs concatenated along the lane axis) and writes it with a single
    full-block store -- no zero-fill pass, no narrow masked stores.
    """
    x = x_ref[...]
    tb = x.shape[0]
    dst_to_src = {int(node): j for j, node in enumerate(nonzero_nodes_index)}

    pieces = []
    zero_run = 0
    for node in range(num_nodes):
        src = dst_to_src.get(node)
        if src is None:
            zero_run += 1
            continue
        if zero_run:
            pieces.append(jnp.zeros((tb, 2 * zero_run), x.dtype))
            zero_run = 0
        pieces.append(x[:, 2 * src:2 * src + 2])
    if zero_run:
        pieces.append(jnp.zeros((tb, 2 * zero_run), x.dtype))

    o_ref[...] = pieces[0] if len(pieces) == 1 else jnp.concatenate(pieces, axis=1)


def decoder_f(f_lat,
              nonzero_nodes_index=NONZERO_NODES_INDEX,
              num_nodes=NUM_NODES,
              block_rows=1024):
    """JAX wrapper reproducing DecoderF.forward (the dec_f of ModelFtD)."""
    k = len(nonzero_nodes_index)
    assert f_lat.shape[-1] == 2 * k, "last dim must equal 2*len(nonzero_nodes_index)"

    lead = f_lat.shape[:-1]
    B = math.prod(lead) if lead else 1
    x2d = f_lat.reshape(B, 2 * k)

    itemsize = jnp.dtype(f_lat.dtype).itemsize
    sub = max(8, 32 // itemsize)                 # sublane packing: 8 f32 / 16 bf16 / 32 int8
    tb = min(block_rows, _round_up(B, sub))      # batch tile (rows per grid step)
    grid = pl.cdiv(B, tb)
    Bp = grid * tb
    if Bp != B:                                  # pad the batch tail to a full tile
        x2d = jnp.pad(x2d, ((0, Bp - B), (0, 0)))

    out_w = 2 * num_nodes
    cost = pl.CostEstimate(
        flops=0,
        transcendentals=0,
        bytes_accessed=int(Bp * (2 * k + out_w) * itemsize),
    )

    kernel = partial(_decoder_f_kernel,
                     nonzero_nodes_index=tuple(nonzero_nodes_index),
                     num_nodes=num_nodes)

    out2d = pl.pallas_call(
        kernel,
        out_shape=jax.ShapeDtypeStruct((Bp, out_w), f_lat.dtype),
        grid=(grid,),
        in_specs=[pl.BlockSpec((tb, 2 * k), lambda i: (i, 0))],
        out_specs=pl.BlockSpec((tb, out_w), lambda i: (i, 0)),
        compiler_params=pltpu.CompilerParams(dimension_semantics=("parallel",)),
        cost_estimate=cost,
    )(x2d)

    if Bp != B:
        out2d = out2d[:B]
    return out2d.reshape(lead + (num_nodes, 2))


def model_ftd_forward(u, latent_backward, f0=None, lr=0.01, nmax=500,
                      enc_u=lambda x: x, enc_f=lambda x: x, dec_f=decoder_f):
    """Mirrors ModelFtD.forward with Identity enc_u/enc_f and dec_f = Pallas DecoderF.

    # TODO(synk): latent_model.backward is an external, unspecified iterative
    # solver; it is taken here as a plain JAX callable rather than a Pallas kernel.
    """
    if f0 is None:
        f0 = jnp.zeros_like(u)
    f_lat_0 = jax.lax.stop_gradient(enc_f(f0))
    u_lat = jax.lax.stop_gradient(enc_u(u))
    f_lat = latent_backward(u_lat, f_lat_0, lr, nmax)
    return dec_f(f_lat)


def decoder_f_reference(f_lat, nonzero_nodes_index=NONZERO_NODES_INDEX, num_nodes=NUM_NODES):
    """Pure-jnp reference (mirrors the PyTorch DecoderF.forward)."""
    k = len(nonzero_nodes_index)
    old = f_lat.reshape(f_lat.shape[:-1] + (k, 2))
    f = jnp.zeros(f_lat.shape[:-1] + (num_nodes, 2), dtype=f_lat.dtype)
    return f.at[..., jnp.array(nonzero_nodes_index), :].set(old)


if __name__ == "__main__":
    key = jax.random.PRNGKey(0)
    k1, k2, k3 = jax.random.split(key, 3)
    two_k = 2 * len(NONZERO_NODES_INDEX)

    # 1) DecoderF kernel, batch=2, seq=8  (B=16, no padding path)
    f_lat = jax.random.normal(k1, (2, 8, two_k), jnp.float32)
    out = decoder_f(f_lat)
    jax.block_until_ready(out)
    ref = decoder_f_reference(f_lat)
    assert out.shape == (2, 8, NUM_NODES, 2)
    assert jnp.allclose(out, ref), "Pallas output mismatch vs reference (case 1)"

    # 2) DecoderF kernel, batch=3, seq=5  (B=15, exercises the padded tail path)
    f_lat_tail = jax.random.normal(k2, (3, 5, two_k), jnp.float32)
    out_tail = decoder_f(f_lat_tail)
    jax.block_until_ready(out_tail)
    ref_tail = decoder_f_reference(f_lat_tail)
    assert out_tail.shape == (3, 5, NUM_NODES, 2)
    assert jnp.allclose(out_tail, ref_tail), "Pallas output mismatch vs reference (case 2)"

    # 3) Full ModelFtD.forward with Identity enc/dec and a simple latent backward.
    u = jax.random.normal(k3, (2, 8, two_k), jnp.float32)
    latent_backward = lambda u_lat, f_lat_0, lr, nmax: u_lat + f_lat_0
    out_model = model_ftd_forward(u, latent_backward)
    jax.block_until_ready(out_model)
    ref_model = decoder_f_reference(u)
    assert out_model.shape == (2, 8, NUM_NODES, 2)
    assert jnp.allclose(out_model, ref_model), "ModelFtD forward mismatch vs reference"

    print("KERNEL_OK")
</pallas_src>

<mosaic_0001>
module attributes {stable_mosaic.version = 11 : i64} {
  func.func @_decoder_f_kernel(%arg0: i32, %arg1: memref<16x2xf32, #tpu.memory_space<vmem>>, %arg2: memref<16x20xf32, #tpu.memory_space<vmem>>) attributes {dimension_semantics = [#tpu.dimension_semantics<parallel>], iteration_bounds = array<i64: 1>, scalar_prefetch = 0 : i64, scratch_operands = 0 : i64, tpu.core_type = #tpu.core_type<tc>, window_params = [{transform_indices = @transform_0, window_bounds = array<i64: 16, 2>}, {transform_indices = @transform_1, window_bounds = array<i64: 16, 20>}]} {
    %c0 = arith.constant 0 : index
    %c0_0 = arith.constant 0 : index
    %0 = vector.load %arg1[%c0, %c0_0] : memref<16x2xf32, #tpu.memory_space<vmem>>, vector<16x2xf32>
    %cst = arith.constant 0.000000e+00 : f32
    %1 = vector.broadcast %cst : f32 to vector<16x18xf32>
    %2 = tpu.concatenate %1, %0 in 1 : vector<16x18xf32>, vector<16x2xf32> -> vector<16x20xf32>
    %c0_1 = arith.constant 0 : index
    %c0_2 = arith.constant 0 : index
    %3 = vector.load %arg2[%c0_1, %c0_2] : memref<16x20xf32, #tpu.memory_space<vmem>>, vector<16x20xf32>
    tpu.vector_store %arg2[%c0_1, %c0_2], %2 {strides = array<i32>} : memref<16x20xf32, #tpu.memory_space<vmem>>, vector<16x20xf32>,
    return
  }
  func.func @transform_0(%arg0: i32) -> (i32, i32) {
    %c0_i32 = arith.constant 0 : i32
    %c0_i32_0 = arith.constant 0 : i32
    return %arg0, %c0_i32 : i32, i32
  }
  func.func @transform_1(%arg0: i32) -> (i32, i32) {
    %c0_i32 = arith.constant 0 : i32
    %c0_i32_0 = arith.constant 0 : i32
    return %arg0, %c0_i32 : i32, i32
  }
}

</mosaic_0001>

<llo_original>
// kernel: tpu_custom_call.1
$region0: #{tpu_custom_call.1}
  #allocation0 [shape = 'u32[]', space=smem, size = 0x4, offset = 0x4, fixed_abs, tag = 'smem constant byte address 0x4 - core index']
  #allocation1 [shape = 'u32[144,128]{1,0:T(1,128)}', space=vmem, size = 0x12000, scoped, tag = 'internal scratch']
  %s0 = inlined_call_operand.vmem [shape: f32[16,2], index: 0, kind: input, shape index: {}]
  %s1 = inlined_call_operand.hbm [shape: f32[16,20], index: 1, kind: output, shape index: {}]
  %s2 = sld [smem:[#allocation0]]
  $region14: #{tpu_custom_call.1} parent=0
    _
  %s4 = ssub.s32 1, %s2
  %s5 = scalar_select 0, %s4, %s2
  $region1: #{tpu_custom_call.1} parent=0
    #allocation2 [shape = 'u8[8192]{0}', space=vmem, size = 0x2000, scoped, tag = 'output window, operand 0, single buffered']
    #allocation3 [shape = 's32[1]{0}', space=sflag, size = 0x4, scoped, tag = 'scoped memory for tpu_custom_call.1']
    %6 = vsyncpa [#allocation3], 0
    // Predicated region
    $region2: #{tpu_custom_call.1} parent=1 // pred_check
      _
    $region3: #{tpu_custom_call.1} parent=1 // pred_check_branch
      %8 = sbr.rel (0) target = $region5
    $region4: #{tpu_custom_call.1} parent=1 // pred_region
      _
    $region5: #{tpu_custom_call.1} parent=1 // pred_fallthru
      _
    %v9 = vld [vmem:[%s0] sm:$0xff]
    %v10 = vld [vmem:[%s0 + $0x8] sm:$0xff]
    %13 = vrot.lane.b32.xlu0 %v9, 18
    %v14 = vpop.permute.xlu0 %13
    %15 = vrot.lane.b32.xlu0 %v10, 18
    %v16 = vpop.permute.xlu0 %15
    %vm19 = vcmask 146432
    %v20 = vsel %vm19, 0.0, %v14
    %v21 = vsel %vm19, 0.0, %v16
    %vm22 = vcmask 162816
    %23 = vst.msk [vmem:[#allocation2] sm:$0xff] %vm22, %v20
    %24 = vst.msk [vmem:[#allocation2 + $0x8] sm:$0xff] %vm22, %v21
    // Predicated region
    $region6: #{tpu_custom_call.1} parent=1 // pred_check
      _
    $region7: #{tpu_custom_call.1} parent=1 // pred_check_branch
      %26 = sbr.rel (0) target = $region9
    $region8: #{tpu_custom_call.1} parent=1 // pred_region
      %s28 = ssub.s32 256, 256
      %29 = vsyncadd [#allocation3], %s28
      %s30 = sshll.u32 [#allocation2], 4
      %s31 = int_to_ptr.vmem [resolvable:$true] %s30
      %36 = dma.vmem_to_hbm [thread:$0]  %s31, 256, %s1, [#allocation3], 128, 128, 8
    $region9: #{tpu_custom_call.1} parent=1 // pred_fallthru
      _
    // Predicated region
    $region10: #{tpu_custom_call.1} parent=1 // pred_check
      _
    $region11: #{tpu_custom_call.1} parent=1 // pred_check_branch
      %38 = sbr.rel (0) target = $region13
    $region12: #{tpu_custom_call.1} parent=1 // pred_region
      %39 = dma.done [#allocation3], 256
    $region13: #{tpu_custom_call.1} parent=1 // pred_fallthru
      _
    %40 = vsyncpa [#allocation3], 1

</llo_original>
